<compile_context>
chip_gen: v5e
topology: v5e:2x2
jax: 0.10.0
libtpu: 0.0.40
codegen_flags: <defaults>
</compile_context>

<pallas_src>
import math
from functools import partial

import jax
import jax.numpy as jnp
from jax import lax
from jax.experimental import pallas as pl
from jax.experimental.pallas import tpu as pltpu

_LANE = 128
_SUBLANE = 8
_INV_SQRT2 = 0.7071067811865476


def _round_up(x, m):
    return (x + m - 1) // m * m


def _gelu_exact(x):
    # exact (erf-based) GELU == torch.nn.GELU() default, f32 math.
    return 0.5 * x * (1.0 + lax.erf(x * jnp.float32(_INV_SQRT2)))


def _pick_tile(dim, align, max_tile):
    """Largest divisor of `dim` that is a multiple of `align` and <= max_tile."""
    cand = (min(max_tile, dim) // align) * align
    while cand >= align:
        if dim % cand == 0:
            return cand
        cand -= align
    return dim  # last resort: one full-extent block (legal, but un-splittable)


# --------------------------- tiled linear (MXU) -----------------------------

def _matmul_bias_kernel(x_ref, w_ref, b_ref, o_ref, acc_ref):
    # x: (tm, tk) bf16, w: (tk, tn) bf16, b: (1, tn) f32 -> o: (tm, tn)
    @pl.when(pl.program_id(2) == 0)
    def _init():
        acc_ref[...] = jnp.zeros_like(acc_ref)

    acc_ref[...] += jnp.dot(
        x_ref[...], w_ref[...], preferred_element_type=jnp.float32)

    @pl.when(pl.program_id(2) == pl.num_programs(2) - 1)
    def _finalize():
        o_ref[...] = (acc_ref[...] + b_ref[...]).astype(o_ref.dtype)


def _linear(x2d, w_bf16, b_row, out_dtype):
    """x2d: (M, K) bf16, w_bf16: (K, N) bf16, b_row: (1, N) f32 -> (M, N)."""
    M, K = x2d.shape
    N = w_bf16.shape[1]
    tm = _pick_tile(M, _SUBLANE, 512)
    tn = _pick_tile(N, _LANE, 512)
    tk = _pick_tile(K, _LANE, 512)
    # v7x megacore: keep >=2 tiles along one 'parallel' axis when possible.
    if M // tm == 1 and N // tn == 1 and tm > _SUBLANE:
        tm2 = _pick_tile(M, _SUBLANE, max(_SUBLANE, tm // 2))
        if M % tm2 == 0 and tm2 < tm:
            tm = tm2
    grid = (M // tm, N // tn, K // tk)

    cost = pl.CostEstimate(
        flops=2 * M * N * K,
        transcendentals=0,
        bytes_accessed=(M * K * 2 + K * N * 2 + N * 4
                        + M * N * jnp.dtype(out_dtype).itemsize))

    return pl.pallas_call(
        _matmul_bias_kernel,
        out_shape=jax.ShapeDtypeStruct((M, N), out_dtype),
        grid_spec=pltpu.PrefetchScalarGridSpec(
            num_scalar_prefetch=0,
            grid=grid,
            in_specs=[
                pl.BlockSpec((tm, tk), lambda i, j, k: (i, k)),
                pl.BlockSpec((tk, tn), lambda i, j, k: (k, j)),
                pl.BlockSpec((1, tn), lambda i, j, k: (0, j)),
            ],
            out_specs=pl.BlockSpec((tm, tn), lambda i, j, k: (i, j)),
            scratch_shapes=[pltpu.VMEM((tm, tn), jnp.float32)]),
        compiler_params=pltpu.CompilerParams(
            dimension_semantics=("parallel", "parallel", "arbitrary"),
            vmem_limit_bytes=32 * 1024 * 1024),
        cost_estimate=cost,
    )(x2d, w_bf16, b_row)


# ------------- depthwise 3x3 conv + cls passthrough + GELU kernel -----------
# Token layout inside this kernel (sublane-aligned):
#   rows 0 .. H*W-1 : spatial tokens (row-major)
#   row  H*W        : cls / weight token (conv bypass, GELU only)
#   rows H*W+1 ..   : zero padding

def _dwconv_cls_gelu_kernel(H, W, x_ref, w_ref, b_ref, o_ref, xpad_ref):
    # x_ref / o_ref: (n_pad, tc) bf16; w_ref: (9, tc) f32; b_ref: (1, tc) f32
    # xpad_ref: (H+2, W+2, tc) f32 VMEM scratch holding the zero halo.
    n_pad, tc = x_ref.shape
    HW = H * W
    x = x_ref[...].astype(jnp.float32)            # single lane-dense block load

    # Zero only the halo ring.  Done EVERY grid step (scratch persists across
    # iterations and, under megacore, each TensorCore has its own copy).
    xpad_ref[pl.ds(0, 1), pl.ds(0, W + 2), :] = jnp.zeros((1, W + 2, tc), jnp.float32)
    xpad_ref[pl.ds(H + 1, 1), pl.ds(0, W + 2), :] = jnp.zeros((1, W + 2, tc), jnp.float32)
    xpad_ref[pl.ds(0, H + 2), pl.ds(0, 1), :] = jnp.zeros((H + 2, 1, tc), jnp.float32)
    xpad_ref[pl.ds(0, H + 2), pl.ds(W + 1, 1), :] = jnp.zeros((H + 2, 1, tc), jnp.float32)
    # Interior filled with ONE bulk store (spatial tokens start at row 0).
    xpad_ref[pl.ds(1, H), pl.ds(1, W), :] = x[0:HW, :].reshape(H, W, tc)
    xpad = xpad_ref[...]

    # 9-tap depthwise MAC (channels on the lane axis -> pure VPU broadcasts).
    # TODO(synk): the kw=0/1/2 slices are sublane-offset; pltpu.roll along W
    # (+ wrap-column mask) would move that shift onto the idle XLU slot.
    w = w_ref[...].astype(jnp.float32)
    acc = jnp.zeros((H, W, tc), jnp.float32)
    for kh in range(3):
        for kw in range(3):
            acc = acc + xpad[kh:kh + H, kw:kw + W, :] * w[3 * kh + kw]
    acc = acc + b_ref[...].astype(jnp.float32)

    # Exact GELU fused here (f32 math); one lane-dense bulk store for the
    # spatial tokens, then the cls passthrough row, then zeroed pad rows so
    # fc2 consumes clean data.
    o_ref[pl.ds(0, HW), :] = _gelu_exact(acc).reshape(HW, tc).astype(o_ref.dtype)
    o_ref[pl.ds(HW, 1), :] = _gelu_exact(x[HW:HW + 1, :]).astype(o_ref.dtype)
    if n_pad > HW + 1:
        o_ref[pl.ds(HW + 1, n_pad - HW - 1), :] = jnp.zeros(
            (n_pad - HW - 1, tc), o_ref.dtype)


def _pick_tc(c_pad, n_pad, H, W):
    # Widest channel tile (lane-dense stores, fewer grid steps) that keeps
    # double-buffered in/out blocks + the halo scratch well inside the 32 MiB
    # scoped VMEM limit (also safe for v7x's 64 MiB part).
    budget = 24 * 1024 * 1024
    for tc in (512, 384, 256, 128):
        if c_pad % tc:
            continue
        need = (2 * 2 * n_pad * tc * 2            # in + out blocks, double-buffered, bf16
                + (H + 2) * (W + 2) * tc * 4      # halo scratch (f32)
                + 2 * 10 * tc * 4)                # weight/bias blocks
        if need <= budget:
            return tc
    return _LANE if c_pad % _LANE == 0 else c_pad


def _dwconv_cls_gelu(h_bnc, w9, b_row, H, W):
    B, n_pad, c_pad = h_bnc.shape
    tc = _pick_tc(c_pad, n_pad, H, W)
    grid = (B, c_pad // tc)
    # TODO(synk): for very large H*W, additionally tile over H-row strips
    # (1-row halo) so blocks + scratch stay within v7x's 64 MiB VMEM.
    return pl.pallas_call(
        partial(_dwconv_cls_gelu_kernel, H, W),
        out_shape=jax.ShapeDtypeStruct((B, n_pad, c_pad), h_bnc.dtype),
        grid_spec=pltpu.PrefetchScalarGridSpec(
            num_scalar_prefetch=0,
            grid=grid,
            in_specs=[
                pl.BlockSpec((None, n_pad, tc), lambda b, c: (b, 0, c)),
                pl.BlockSpec((9, tc), lambda b, c: (0, c)),
                pl.BlockSpec((1, tc), lambda b, c: (0, c)),
            ],
            out_specs=pl.BlockSpec((None, n_pad, tc), lambda b, c: (b, 0, c)),
            scratch_shapes=[pltpu.VMEM((H + 2, W + 2, tc), jnp.float32)]),
        compiler_params=pltpu.CompilerParams(
            dimension_semantics=("parallel", "parallel"),
            vmem_limit_bytes=32 * 1024 * 1024),
    )(h_bnc, w9, b_row)


# ------------------------------ parameters ----------------------------------

def prepare_params(params):
    """One-time (load-time) padding to lane multiples + bf16 weight cast."""
    C_in, hidden = params["w1"].shape
    C_out = params["w2"].shape[1]
    kp = _round_up(C_in, _LANE)
    hp = _round_up(hidden, _LANE)
    op = _round_up(C_out, _LANE)
    return {
        "kp": kp, "hp": hp, "op": op, "c_out": C_out,
        "w1": jnp.pad(params["w1"], ((0, kp - C_in), (0, hp - hidden))
                      ).astype(jnp.bfloat16),
        "b1": jnp.pad(params["b1"], (0, hp - hidden)).reshape(1, hp
                      ).astype(jnp.float32),
        "w2": jnp.pad(params["w2"], ((0, hp - hidden), (0, op - C_out))
                      ).astype(jnp.bfloat16),
        "b2": jnp.pad(params["b2"], (0, op - C_out)).reshape(1, op
                      ).astype(jnp.float32),
        "wc": jnp.pad(params["wconv"].reshape(9, hidden),
                      ((0, 0), (0, hp - hidden))).astype(jnp.float32),
        "bc": jnp.pad(params["bconv"], (0, hp - hidden)).reshape(1, hp
                      ).astype(jnp.float32),
    }


# ------------------------------ forward pass --------------------------------

def mlp_forward(x, prep, H, W):
    """x: (B, N, C_in) with N = 1 + H*W (token 0 is the cls/weight token)."""
    B, N, C_in = x.shape
    HW = H * W
    assert N == HW + 1, (N, HW)
    kp, hp, op, C_out = prep["kp"], prep["hp"], prep["op"], prep["c_out"]

    # Token axis padded only to a sublane multiple; spatial tokens re-laid out
    # first (rows 0..HW-1) so all dwconv accesses are sublane-aligned.
    np_ = _round_up(N, _SUBLANE)
    x_re = jnp.concatenate([x[:, 1:, :], x[:, :1, :]], axis=1)
    xp = jnp.pad(x_re, ((0, 0), (0, np_ - N), (0, kp - C_in))).astype(jnp.bfloat16)

    # fc1: tiled bf16 MXU matmul, f32 accumulate, bf16 intermediate out.
    h = _linear(xp.reshape(B * np_, kp), prep["w1"], prep["b1"], jnp.bfloat16)
    h = h.reshape(B, np_, hp)                     # contiguous -> free reshape

    # depthwise 3x3 conv on the spatial tokens + cls passthrough + GELU,
    # fused in one kernel (no host-side pad / slice / concat passes).
    h = _dwconv_cls_gelu(h, prep["wc"], prep["bc"], H, W)

    # fc2 (+ dropout p=0 identity), f32 output.
    out = _linear(h.reshape(B * np_, hp), prep["w2"], prep["b2"], jnp.float32)
    out = out.reshape(B, np_, op)

    # Un-permute tokens (cls back to position 0) and drop padding.
    return jnp.concatenate(
        [out[:, HW:HW + 1, :C_out], out[:, :HW, :C_out]], axis=1)


# ------------------------------ reference -----------------------------------

def ref_forward(x, params, H, W):
    B, N, _ = x.shape
    hidden = params["w1"].shape[1]
    h = x @ params["w1"] + params["b1"]
    wt = h[:, :1]
    tok = h[:, 1:].reshape(B, H, W, hidden)
    kern = params["wconv"].reshape(3, 3, 1, hidden)
    conv = lax.conv_general_dilated(
        tok, kern, (1, 1), "SAME",
        dimension_numbers=("NHWC", "HWIO", "NHWC"),
        feature_group_count=hidden) + params["bconv"]
    h = jnp.concatenate([wt, conv.reshape(B, H * W, hidden)], axis=1)
    h = jax.nn.gelu(h, approximate=False)
    return h @ params["w2"] + params["b2"]


# -------------------------------- main ---------------------------------------

if __name__ == "__main__":
    B, H, W = 2, 8, 8
    C_in, hidden, C_out = 16, 32, 16
    N = 1 + H * W

    key = jax.random.PRNGKey(0)
    k1, k2, k3, kx = jax.random.split(key, 4)

    # deterministic synthetic init mirroring the module's _init_weights:
    #   Linear: trunc_normal(std=0.02), bias 0
    #   Conv2d depthwise 3x3: normal(0, sqrt(2 / fan_out)), fan_out = 9, bias 0
    params = {
        "w1": (jax.random.truncated_normal(k1, -2.0, 2.0, (C_in, hidden),
                                           jnp.float32) * 0.02),
        "b1": jnp.zeros((hidden,), jnp.float32),
        "wconv": (jax.random.normal(k3, (3, 3, hidden), jnp.float32)
                  * jnp.float32(math.sqrt(2.0 / 9.0))),
        "bconv": jnp.zeros((hidden,), jnp.float32),
        "w2": (jax.random.truncated_normal(k2, -2.0, 2.0, (hidden, C_out),
                                           jnp.float32) * 0.02),
        "b2": jnp.zeros((C_out,), jnp.float32),
    }

    x = jax.random.normal(kx, (B, N, C_in), jnp.float32)

    prep = jax.tree_util.tree_map(jax.block_until_ready, prepare_params(params))

    out = jax.block_until_ready(mlp_forward(x, prep, H, W))
    ref = jax.block_until_ready(ref_forward(x, params, H, W))

    assert out.shape == (B, N, C_out), out.shape
    max_err = float(jnp.max(jnp.abs(out - ref)))
    # bf16 activations/weights (f32 accumulation) -> relaxed tolerance vs f32 ref
    assert jnp.allclose(out, ref, atol=3e-3, rtol=3e-2), max_err

    print("KERNEL_OK")
</pallas_src>

<mosaic_0001>
module attributes {stable_mosaic.version = 11 : i64} {
  func.func @_matmul_bias_kernel(%arg0: i32, %arg1: i32, %arg2: i32, %arg3: memref<72x128xbf16, #tpu.memory_space<vmem>>, %arg4: memref<128x128xbf16, #tpu.memory_space<vmem>>, %arg5: memref<1x128xf32, #tpu.memory_space<vmem>>, %arg6: memref<72x128xbf16, #tpu.memory_space<vmem>>, %arg7: memref<72x128xf32, #tpu.memory_space<vmem>>) attributes {dimension_semantics = [#tpu.dimension_semantics<parallel>, #tpu.dimension_semantics<parallel>, #tpu.dimension_semantics<arbitrary>], iteration_bounds = array<i64: 2, 1, 1>, scalar_prefetch = 0 : i64, scratch_operands = 1 : i64, tpu.core_type = #tpu.core_type<tc>, window_params = [{transform_indices = @transform_0, window_bounds = array<i64: 72, 128>}, {transform_indices = @transform_1, window_bounds = array<i64: 128, 128>}, {transform_indices = @transform_2, window_bounds = array<i64: 1, 128>}, {transform_indices = @transform_3, window_bounds = array<i64: 72, 128>}]} {
    %c0_i32 = arith.constant 0 : i32
    %0 = arith.cmpi eq, %arg2, %c0_i32 : i32
    %1 = arith.extui %0 : i1 to i32
    %c0_i32_0 = arith.constant 0 : i32
    %2 = arith.cmpi ne, %1, %c0_i32_0 : i32
    scf.if %2 {
      %cst_10 = arith.constant 0.000000e+00 : f32
      %12 = vector.broadcast %cst_10 : f32 to vector<72x128xf32>
      %c0_11 = arith.constant 0 : index
      %c0_12 = arith.constant 0 : index
      %13 = vector.load %arg7[%c0_11, %c0_12] : memref<72x128xf32, #tpu.memory_space<vmem>>, vector<72x128xf32>
      tpu.vector_store %arg7[%c0_11, %c0_12], %12 {strides = array<i32>} : memref<72x128xf32, #tpu.memory_space<vmem>>, vector<72x128xf32>,
    } else {
    }
    %c0 = arith.constant 0 : index
    %c0_1 = arith.constant 0 : index
    %3 = vector.load %arg7[%c0, %c0_1] : memref<72x128xf32, #tpu.memory_space<vmem>>, vector<72x128xf32>
    %c0_2 = arith.constant 0 : index
    %c0_3 = arith.constant 0 : index
    %4 = vector.load %arg3[%c0_2, %c0_3] : memref<72x128xbf16, #tpu.memory_space<vmem>>, vector<72x128xbf16>
    %c0_4 = arith.constant 0 : index
    %c0_5 = arith.constant 0 : index
    %5 = vector.load %arg4[%c0_4, %c0_5] : memref<128x128xbf16, #tpu.memory_space<vmem>>, vector<128x128xbf16>
    %cst = arith.constant dense<0.000000e+00> : vector<72x128xf32>
    %6 = tpu.matmul %4, %5, %cst {dimension_numbers = #tpu.dot_dimension_numbers<[1], [0], [0], [1], [0, 0, 1, 1], [], []>} : vector<72x128xbf16>, vector<128x128xbf16>, vector<72x128xf32> -> vector<72x128xf32>
    %7 = arith.addf %3, %6 : vector<72x128xf32>
    %c0_6 = arith.constant 0 : index
    %c0_7 = arith.constant 0 : index
    %8 = vector.load %arg7[%c0_6, %c0_7] : memref<72x128xf32, #tpu.memory_space<vmem>>, vector<72x128xf32>
    tpu.vector_store %arg7[%c0_6, %c0_7], %7 {strides = array<i32>} : memref<72x128xf32, #tpu.memory_space<vmem>>, vector<72x128xf32>,
    %c0_i32_8 = arith.constant 0 : i32
    %9 = arith.cmpi eq, %arg2, %c0_i32_8 : i32
    %10 = arith.extui %9 : i1 to i32
    %c0_i32_9 = arith.constant 0 : i32
    %11 = arith.cmpi ne, %10, %c0_i32_9 : i32
    scf.if %11 {
      %c0_10 = arith.constant 0 : index
      %c0_11 = arith.constant 0 : index
      %12 = vector.load %arg7[%c0_10, %c0_11] : memref<72x128xf32, #tpu.memory_space<vmem>>, vector<72x128xf32>
      %c0_12 = arith.constant 0 : index
      %c0_13 = arith.constant 0 : index
      %13 = vector.load %arg5[%c0_12, %c0_13] : memref<1x128xf32, #tpu.memory_space<vmem>>, vector<1x128xf32>
      %14 = vector.broadcast %13 : vector<1x128xf32> to vector<72x128xf32>
      %15 = arith.addf %12, %14 : vector<72x128xf32>
      %16 = arith.truncf %15 : vector<72x128xf32> to vector<72x128xbf16>
      %c0_14 = arith.constant 0 : index
      %c0_15 = arith.constant 0 : index
      %17 = vector.load %arg6[%c0_14, %c0_15] : memref<72x128xbf16, #tpu.memory_space<vmem>>, vector<72x128xbf16>
      tpu.vector_store %arg6[%c0_14, %c0_15], %16 {strides = array<i32>} : memref<72x128xbf16, #tpu.memory_space<vmem>>, vector<72x128xbf16>,
    } else {
    }
    return
  }
  func.func @transform_0(%arg0: i32, %arg1: i32, %arg2: i32) -> (i32, i32) {
    %c0_i32 = arith.constant 0 : i32
    return %arg0, %arg2 : i32, i32
  }
  func.func @transform_1(%arg0: i32, %arg1: i32, %arg2: i32) -> (i32, i32) {
    %c0_i32 = arith.constant 0 : i32
    return %arg2, %arg1 : i32, i32
  }
  func.func @transform_2(%arg0: i32, %arg1: i32, %arg2: i32) -> (i32, i32) {
    %c0_i32 = arith.constant 0 : i32
    %c0_i32_0 = arith.constant 0 : i32
    return %c0_i32, %arg1 : i32, i32
  }
  func.func @transform_3(%arg0: i32, %arg1: i32, %arg2: i32) -> (i32, i32) {
    %c0_i32 = arith.constant 0 : i32
    return %arg0, %arg1 : i32, i32
  }
}

</mosaic_0001>

<llo_original>
// kernel: tpu_custom_call.1
$region0: #{tpu_custom_call.1}
  #allocation0 [shape = 'u32[]', space=smem, size = 0x4, offset = 0x4, fixed_abs, tag = 'smem constant byte address 0x4 - core index']
  #allocation1 [shape = 'u32[72,128]{1,0:T(1,128)}', space=vmem, size = 0x9000, scoped, tag = 'internal scratch']
  #allocation2 [shape = 'f32[72,128]{1,0:T(8,128)}', space=vmem, size = 0x9000, scoped, tag = 'scratch operand']
  %s0 = inlined_call_operand.hbm [shape: bf16[144,128], index: 0, kind: input, shape index: {}]
  %s1 = inlined_call_operand.hbm [shape: bf16[128,128], index: 1, kind: input, shape index: {}]
  %s2 = inlined_call_operand.vmem [shape: f32[1,128], index: 2, kind: input, shape index: {}]
  %s3 = inlined_call_operand.hbm [shape: bf16[144,128], index: 3, kind: output, shape index: {}]
  %s4 = sld [smem:[#allocation0]]
  $region61: #{tpu_custom_call.1} parent=0
    _
  %s6 = ssub.s32 1, %s4
  %s7 = scalar_select 0, %s6, %s4
  $region1: #{tpu_custom_call.1} parent=0
    #allocation3 [shape = 'u8[36864]{0}', space=vmem, size = 0x9000, scoped, tag = 'input window, operand 0']
    #allocation4 [shape = 's32[2]{0}', space=sflag, size = 0x8, scoped, tag = 'scoped memory for tpu_custom_call.1']
    #allocation5 [shape = 's32[2]{0}', space=sflag, size = 0x8, scoped, tag = 'scoped memory for tpu_custom_call.1']
    #allocation6 [shape = 'u8[32768]{0}', space=vmem, size = 0x8000, scoped, tag = 'input window, operand 1, single buffered']
    #allocation7 [shape = 's32[1]{0}', space=sflag, size = 0x4, scoped, tag = 'scoped memory for tpu_custom_call.1']
    #allocation8 [shape = 'u8[36864]{0}', space=vmem, size = 0x9000, scoped, tag = 'output window, operand 0']
    %8 = vsyncpa [#allocation4], 0
    %s9 = scalar_lea.sflag [#allocation4], 1
    %10 = vsyncpa %s9, 0
    %11 = vsyncpa [#allocation7], 0
    %12 = vsyncpa [#allocation5], 0
    %s13 = scalar_lea.sflag [#allocation5], 1
    %14 = vsyncpa %s13, 0
    loop: start=0, step=1, limit=4
    $region2: #{tpu_custom_call.1} parent=1 // loop_pre_header
      _
    $region3: #{tpu_custom_call.1} parent=1 // loop_header
      %s16 = sphi 0, %s20
      %p17 = scmp.ge.s32.totalorder %s16, 4
      %s23 = sphi 0, %s42
      %s24 = sphi 0, %s38
      %s25 = sphi 0, %s34
      %s26 = sphi 0, %s23
      %s27 = sphi 0, %s24
      %s28 = sphi 0, %s25
      %s29 = sphi 0, %s26
      %s30 = sphi 0, %s27
      %s31 = sphi 0, %s28
      %s47 = sphi 0, %s49
      %s50 = sphi 0, %s47
      %s51 = sphi 0, %s50
      %s67 = sphi 0, %s51
      %s75 = sphi 0, %s77
      %s78 = sphi 0, %s75
      %s79 = sphi 0, %s78
      %s95 = sphi 0, %s79
      %s101 = sphi 0, %s103
      %s104 = sphi 0, %s101
      %s105 = sphi 0, %s104
      %s121 = sphi 0, %s105
      %s129 = sphi 0, %s131
      %s132 = sphi 0, %s129
      %s133 = sphi 0, %s132
      %s149 = sphi 0, %s133
    $region4: #{tpu_custom_call.1} parent=1 // loop_header_branch
      %19 = sbr.rel (%p17) target = $region8
    $region5: #{tpu_custom_call.1} parent=1 // loop_body
      %s21 = ssub.s32 %s16, 1
      %s22 = ssub.s32 %s16, 2
      %s32 = sadd.s32 1, %s25
      %p33 = scmp.ge.s32.totalorder %s32, 1
      %s34 = scalar_select %p33, 0, %s32
      %s35 = sadd.s32 1, %s24
      %s36 = scalar_select %p33, %s35, %s24
      %p37 = scmp.ge.s32.totalorder %s36, 1
      %s38 = scalar_select %p37, 0, %s36
      %s39 = sadd.s32 1, %s23
      %s40 = scalar_select %p37, %s39, %s23
      %p41 = scmp.ge.s32.totalorder %s40, 2
      %s42 = scalar_select %p41, 0, %s40
      %s43 = ssub.s32 %s23, %s42
      %s44 = ssub.s32 %s25, %s34
      %s45 = sor.u32 %s43, %s44
      %p46 = scmp.eq.s32.totalorder %s45, 0
      %s48 = sadd.s32 %s47, 1
      %s49 = scalar_select %p46, %s47, %s48
      %p52 = pneg %p46
      %p53 = scmp.eq.s32.totalorder %s16, 1
      %p54 = por %p52, %p53
      %p55 = scmp.ne.s32.totalorder %s47, %s50
      %p56 = scmp.eq.s32.totalorder %s16, 0
      %p57 = por %p55, %p56
      %p58 = scmp.ne.s32.totalorder %s47, %s50
      %p59 = scmp.eq.s32.totalorder %s21, 1
      %p60 = por %p58, %p59
      %p61 = scmp.ne.s32.totalorder %s50, %s51
      %p62 = scmp.eq.s32.totalorder %s21, 0
      %p63 = por %p61, %p62
      %p64 = scmp.ne.s32.totalorder %s50, %s51
      %p65 = scmp.eq.s32.totalorder %s22, 1
      %p66 = por %p64, %p65
      %p68 = scmp.ne.s32.totalorder %s51, %s67
      %p69 = scmp.eq.s32.totalorder %s22, 0
      %p70 = por %p68, %p69
      %s71 = ssub.s32 %s25, %s34
      %s72 = ssub.s32 %s24, %s38
      %s73 = sor.u32 %s71, %s72
      %p74 = scmp.eq.s32.totalorder %s73, 0
      %s76 = sadd.s32 %s75, 1
      %s77 = scalar_select %p74, %s75, %s76
      %p80 = pneg %p74
      %p81 = scmp.eq.s32.totalorder %s16, 1
      %p82 = por %p80, %p81
      %p83 = scmp.ne.s32.totalorder %s75, %s78
      %p84 = scmp.eq.s32.totalorder %s16, 0
      %p85 = por %p83, %p84
      %p86 = scmp.ne.s32.totalorder %s75, %s78
      %p87 = scmp.eq.s32.totalorder %s21, 1
      %p88 = por %p86, %p87
      %p89 = scmp.ne.s32.totalorder %s78, %s79
      %p90 = scmp.eq.s32.totalorder %s21, 0
      %p91 = por %p89, %p90
      %p92 = scmp.ne.s32.totalorder %s78, %s79
      %p93 = scmp.eq.s32.totalorder %s22, 1
      %p94 = por %p92, %p93
      %p96 = scmp.ne.s32.totalorder %s79, %s95
      %p97 = scmp.eq.s32.totalorder %s22, 0
      %p98 = por %p96, %p97
      %s99 = ssub.s32 %s24, %s38
      %p100 = scmp.eq.s32.totalorder %s99, 0
      %s102 = sadd.s32 %s101, 1
      %s103 = scalar_select %p100, %s101, %s102
      %p106 = pneg %p100
      %p107 = scmp.eq.s32.totalorder %s16, 1
      %p108 = por %p106, %p107
      %p109 = scmp.ne.s32.totalorder %s101, %s104
      %p110 = scmp.eq.s32.totalorder %s16, 0
      %p111 = por %p109, %p110
      %p112 = scmp.ne.s32.totalorder %s101, %s104
      %p113 = scmp.eq.s32.totalorder %s21, 1
      %p114 = por %p112, %p113
      %p115 = scmp.ne.s32.totalorder %s104, %s105
      %p116 = scmp.eq.s32.totalorder %s21, 0
      %p117 = por %p115, %p116
      %p118 = scmp.ne.s32.totalorder %s104, %s105
      %p119 = scmp.eq.s32.totalorder %s22, 1
      %p120 = por %p118, %p119
      %p122 = scmp.ne.s32.totalorder %s105, %s121
      %p123 = scmp.eq.s32.totalorder %s22, 0
      %p124 = por %p122, %p123
      %s125 = ssub.s32 %s23, %s42
      %s126 = ssub.s32 %s24, %s38
      %s127 = sor.u32 %s125, %s126
      %p128 = scmp.eq.s32.totalorder %s127, 0
      %s130 = sadd.s32 %s129, 1
      %s131 = scalar_select %p128, %s129, %s130
      %p134 = pneg %p128
      %p135 = scmp.eq.s32.totalorder %s16, 1
      %p136 = por %p134, %p135
      %p137 = scmp.ne.s32.totalorder %s129, %s132
      %p138 = scmp.eq.s32.totalorder %s16, 0
      %p139 = por %p137, %p138
      %p140 = scmp.ne.s32.totalorder %s129, %s132
      %p141 = scmp.eq.s32.totalorder %s21, 1
      %p142 = por %p140, %p141
      %p143 = scmp.ne.s32.totalorder %s132, %s133
      %p144 = scmp.eq.s32.totalorder %s21, 0
      %p145 = por %p143, %p144
      %p146 = scmp.ne.s32.totalorder %s132, %s133
      %p147 = scmp.eq.s32.totalorder %s22, 1
      %p148 = por %p146, %p147
      %p150 = scmp.ne.s32.totalorder %s133, %s149
      %p151 = scmp.eq.s32.totalorder %s22, 0
      %p152 = por %p150, %p151
      %p153 = scmp.le.s32.totalorder 1, %s16
      %p154 = scmp.lt.s32.totalorder %s16, 3
      %p155 = pnand %p153, %p154
      %p156 = pneg %p155
      // Predicated region
      $region9: #{tpu_custom_call.1} parent=5 // pred_check
        _
      $region10: #{tpu_custom_call.1} parent=5 // pred_check_branch
        %158 = sbr.rel (%p155) target = $region12
      $region11: #{tpu_custom_call.1} parent=5 // pred_region
        %s159 = ssub.s32 %s16, 1
        // Predicated region
        $region13: #{tpu_custom_call.1} parent=11 // pred_check
          %p160 = pneg %p91
        $region14: #{tpu_custom_call.1} parent=11 // pred_check_branch
          %162 = sbr.rel (%p160) target = $region16
        $region15: #{tpu_custom_call.1} parent=11 // pred_region
          %s163 = smul.u32 16, %s28
          %165 = vsyncadd [#allocation7], 0
          %s166 = sadd.s32 %s27, %s163
          %s167 = smul.addr %s166, 4
          %s168 = scalar_lea.hbm %s1, %s167
          %s169 = sshll.u32 %s168, 4
          %s170 = int_to_ptr.hbm [resolvable:$true] %s169
          %s171 = sshll.u32 [#allocation6], 4
          %s172 = int_to_ptr.vmem [resolvable:$true] %s171
          %177 = dma.hbm_to_vmem [thread:$0]  %s170, 1024, %s172, [#allocation7], 64, 64, 4
        $region16: #{tpu_custom_call.1} parent=11 // pred_fallthru
          _
        // Predicated region
        $region17: #{tpu_custom_call.1} parent=11 // pred_check
          %p178 = pneg %p117
        $region18: #{tpu_custom_call.1} parent=11 // pred_check_branch
          %180 = sbr.rel (%p178) target = $region20
        $region19: #{tpu_custom_call.1} parent=11 // pred_region
          %p181 = scmp.lt.s32.totalorder %s27, 0
          %s182 = scalar_select %p181, %s27, 0
          %s183 = scalar_lea.vmem %s2, %s182
        $region20: #{tpu_custom_call.1} parent=11 // pred_fallthru
          _
      $region12: #{tpu_custom_call.1} parent=5 // pred_fallthru
        _
      %p184 = scmp.lt.s32.totalorder %s16, 2
      // Predicated region
      $region21: #{tpu_custom_call.1} parent=5 // pred_check
        %p185 = pneg %p184
      $region22: #{tpu_custom_call.1} parent=5 // pred_check_branch
        %187 = sbr.rel (%p185) target = $region24
      $region23: #{tpu_custom_call.1} parent=5 // pred_region
        // Predicated region
        $region25: #{tpu_custom_call.1} parent=23 // pred_check
          %p188 = pneg %p57
        $region26: #{tpu_custom_call.1} parent=23 // pred_check_branch
          %190 = sbr.rel (%p188) target = $region28
        $region27: #{tpu_custom_call.1} parent=23 // pred_region
          %s191 = sand.u32 %s47, 1
          %s192 = scalar_lea.sflag [#allocation4], %s191
          %s193 = sand.u32 %s47, 1
          %s194 = smul.addr %s193, 36
          %s195 = scalar_lea.vmem [#allocation3], %s194
          %s196 = smul.u32 9, %s23
          %198 = vsyncadd %s192, 0
          %s199 = sadd.s32 %s25, %s196
          %s200 = smul.addr %s199, 4
          %s201 = scalar_lea.hbm %s0, %s200
          %s202 = sshll.u32 %s201, 4
          %s203 = int_to_ptr.hbm [resolvable:$true] %s202
          %s204 = sshll.u32 %s195, 4
          %s205 = int_to_ptr.vmem [resolvable:$true] %s204
          %210 = dma.hbm_to_vmem [thread:$0]  %s203, 576, %s205, %s192, 64, 64, 4
        $region28: #{tpu_custom_call.1} parent=23 // pred_fallthru
          _
      $region24: #{tpu_custom_call.1} parent=5 // pred_fallthru
        _
      %p211 = scmp.le.s32.totalorder 1, %s16
      %p212 = scmp.lt.s32.totalorder %s16, 3
      %p213 = pnand %p211, %p212
      %p214 = pneg %p213
      // Predicated region
      $region29: #{tpu_custom_call.1} parent=5 // pred_check
        _
      $region30: #{tpu_custom_call.1} parent=5 // pred_check_branch
        %216 = sbr.rel (%p213) target = $region32
      $region31: #{tpu_custom_call.1} parent=5 // pred_region
        %s217 = ssub.s32 %s16, 1
        %s218 = sand.u32 %s50, 1
        %s219 = scalar_lea.sflag [#allocation4], %s218
        %s220 = sand.u32 %s50, 1
        %s221 = smul.addr %s220, 36
        %s222 = scalar_lea.vmem [#allocation3], %s221
        // Predicated region
        $region33: #{tpu_custom_call.1} parent=31 // pred_check
          %p223 = pneg %p63
        $region34: #{tpu_custom_call.1} parent=31 // pred_check_branch
          %225 = sbr.rel (%p223) target = $region36
        $region35: #{tpu_custom_call.1} parent=31 // pred_region
          %227 = dma.done %s219, 576
        $region36: #{tpu_custom_call.1} parent=31 // pred_fallthru
          _
        // Predicated region
        $region37: #{tpu_custom_call.1} parent=31 // pred_check
          %p228 = pneg %p91
        $region38: #{tpu_custom_call.1} parent=31 // pred_check_branch
          %230 = sbr.rel (%p228) target = $region40
        $region39: #{tpu_custom_call.1} parent=31 // pred_region
          %232 = dma.done [#allocation7], 1024
        $region40: #{tpu_custom_call.1} parent=31 // pred_fallthru
          _
        %s233 = sand.u32 %s50, 1
        %s234 = scalar_lea.sflag [#allocation4], %s233
        %s235 = sand.u32 %s50, 1
        %s236 = smul.addr %s235, 36
        %s237 = scalar_lea.vmem [#allocation3], %s236
        %p238 = pneg %p63
        %p239 = pneg %p60
        %p240 = pneg %p91
        %p241 = pneg %p88
        %p242 = scmp.lt.s32.totalorder %s27, 0
        %s243 = scalar_select %p242, %s27, 0
        %s244 = scalar_lea.vmem %s2, %s243
        %p245 = pneg %p117
        %p246 = pneg %p114
        %p247 = pneg %p145
        %p248 = pneg %p142
        %s249 = sand.u32 %s132, 1
        %s250 = scalar_lea.sflag [#allocation5], %s249
        %s251 = sand.u32 %s132, 1
        %s252 = smul.addr %s251, 36
        %s253 = scalar_lea.vmem [#allocation8], %s252
        %s254 = smul.u32 9, %s26
        %s255 = smul.u32 16, %s28
        %p256 = scmp.lt.s32.totalorder %s27, 0
        %s257 = scalar_select %p256, %s27, 0
        %s258 = scalar_lea.vmem %s2, %s257
        %s259 = smul.u32 9, %s26
        %p260 = scmp.eq.s32.totalorder %s28, 0
        // Predicated region
        $region41: #{tpu_custom_call.1} parent=31 // pred_check
          %p261 = pneg %p260
        $region42: #{tpu_custom_call.1} parent=31 // pred_check_branch
          %263 = sbr.rel (%p261) target = $region44
        $region43: #{tpu_custom_call.1} parent=31 // pred_region
          %264 = vst [vmem:[#allocation2] sm:$0xff] 0.0
          %265 = vst [vmem:[#allocation2 + $0x8] sm:$0xff] 0.0
          %266 = vst [vmem:[#allocation2 + $0x10] sm:$0xff] 0.0
          %267 = vst [vmem:[#allocation2 + $0x18] sm:$0xff] 0.0
          %268 = vst [vmem:[#allocation2 + $0x20] sm:$0xff] 0.0
          %269 = vst [vmem:[#allocation2 + $0x28] sm:$0xff] 0.0
          %270 = vst [vmem:[#allocation2 + $0x30] sm:$0xff] 0.0
          %271 = vst [vmem:[#allocation2 + $0x38] sm:$0xff] 0.0
          %272 = vst [vmem:[#allocation2 + $0x40] sm:$0xff] 0.0
        $region44: #{tpu_custom_call.1} parent=31 // pred_fallthru
          _
        %v273 = vld [vmem:[#allocation2] sm:$0xff]
        %v274 = vld [vmem:[#allocation2 + $0x8] sm:$0xff]
        %v275 = vld [vmem:[#allocation2 + $0x10] sm:$0xff]
        %v276 = vld [vmem:[#allocation2 + $0x18] sm:$0xff]
        %v277 = vld [vmem:[#allocation2 + $0x20] sm:$0xff]
        %v278 = vld [vmem:[#allocation2 + $0x28] sm:$0xff]
        %v279 = vld [vmem:[#allocation2 + $0x30] sm:$0xff]
        %v280 = vld [vmem:[#allocation2 + $0x38] sm:$0xff]
        %v281 = vld [vmem:[#allocation2 + $0x40] sm:$0xff]
        %v282 = vld [vmem:[%s222] sm:$0xf]
        %v283 = vld [vmem:[%s222 + $0x4] sm:$0xf]
        %v284 = vld [vmem:[%s222 + $0x8] sm:$0xf]
        %v285 = vld [vmem:[%s222 + $0xc] sm:$0xf]
        %v286 = vld [vmem:[%s222 + $0x10] sm:$0xf]
        %v287 = vld [vmem:[%s222 + $0x14] sm:$0xf]
        %v288 = vld [vmem:[%s222 + $0x18] sm:$0xf]
        %v289 = vld [vmem:[%s222 + $0x1c] sm:$0xf]
        %v290 = vld [vmem:[%s222 + $0x20] sm:$0xf]
        %v291 = vld [vmem:[#allocation6] sm:$0xf]
        %v292 = vld [vmem:[#allocation6 + $0x4] sm:$0xf]
        %v293 = vld [vmem:[#allocation6 + $0x8] sm:$0xf]
        %v294 = vld [vmem:[#allocation6 + $0xc] sm:$0xf]
        %v295 = vld [vmem:[#allocation6 + $0x10] sm:$0xf]
        %v296 = vld [vmem:[#allocation6 + $0x14] sm:$0xf]
        %v297 = vld [vmem:[#allocation6 + $0x18] sm:$0xf]
        %v298 = vld [vmem:[#allocation6 + $0x1c] sm:$0xf]
        %v299 = vld [vmem:[#allocation6 + $0x20] sm:$0xf]
        %v300 = vld [vmem:[#allocation6 + $0x24] sm:$0xf]
        %v301 = vld [vmem:[#allocation6 + $0x28] sm:$0xf]
        %v302 = vld [vmem:[#allocation6 + $0x2c] sm:$0xf]
        %v303 = vld [vmem:[#allocation6 + $0x30] sm:$0xf]
        %v304 = vld [vmem:[#allocation6 + $0x34] sm:$0xf]
        %v305 = vld [vmem:[#allocation6 + $0x38] sm:$0xf]
        %v306 = vld [vmem:[#allocation6 + $0x3c] sm:$0xf]
        %v316 = vunpack.c.l.b16 %v282
        %v317 = vunpack.c.l.b16 %v283
        %v318 = vunpack.c.l.b16 %v284
        %v319 = vunpack.c.l.b16 %v285
        %v320 = vunpack.c.l.b16 %v286
        %v321 = vunpack.c.l.b16 %v287
        %v322 = vunpack.c.l.b16 %v288
        %v323 = vunpack.c.l.b16 %v289
        %v324 = vunpack.c.l.b16 %v290
        %v325 = vpack.c.b16 %v317, %v316
        %v326 = vpack.c.b16 %v319, %v318
        %v327 = vpack.c.b16 %v321, %v320
        %v328 = vpack.c.b16 %v323, %v322
        %v329 = vpack.c.b16 %v324, %v324
        %v351 = vunpack.c.l.b16 %v291
        %v352 = vunpack.c.l.b16 %v292
        %v353 = vunpack.c.l.b16 %v293
        %v354 = vunpack.c.l.b16 %v294
        %v355 = vunpack.c.l.b16 %v295
        %v356 = vunpack.c.l.b16 %v296
        %v357 = vunpack.c.l.b16 %v297
        %v358 = vunpack.c.l.b16 %v298
        %v359 = vunpack.c.l.b16 %v299
        %v360 = vunpack.c.l.b16 %v300
        %v361 = vunpack.c.l.b16 %v301
        %v362 = vunpack.c.l.b16 %v302
        %v363 = vunpack.c.l.b16 %v303
        %v364 = vunpack.c.l.b16 %v304
        %v365 = vunpack.c.l.b16 %v305
        %v366 = vunpack.c.l.b16 %v306
        %v367 = vpack.c.b16 %v352, %v351
        %v368 = vpack.c.b16 %v354, %v353
        %v369 = vpack.c.b16 %v356, %v355
        %v370 = vpack.c.b16 %v358, %v357
        %v371 = vpack.c.b16 %v360, %v359
        %v372 = vpack.c.b16 %v362, %v361
        %v373 = vpack.c.b16 %v364, %v363
        %v374 = vpack.c.b16 %v366, %v365
        %383 = vmatpush.bf16.msra.mxu0 %v374
        %384 = vmatpush.bf16.msra.mxu0 %v373
        %385 = vmatpush.bf16.msra.mxu0 %v372
        %386 = vmatpush.bf16.msra.mxu0 %v371
        %387 = vmatpush.bf16.msra.mxu0 %v370
        %388 = vmatpush.bf16.msra.mxu0 %v369
        %389 = vmatpush.bf16.msra.mxu0 %v368
        %390 = vmatpush.bf16.msra.mxu0 %v367
        %391 = vmatmul.bf16.gmra.mxu0 %v325
        %v392 = vpop.f32.mrf.mxu0
        %v393 = vadd.f32 0.0, %v392
        %v394 = vpop.f32.mrf.mxu0
        %v395 = vadd.f32 0.0, %v394
        %396 = vmatmul.bf16.gmra.mxu0 %v326
        %v397 = vpop.f32.mrf.mxu0
        %v398 = vadd.f32 0.0, %v397
        %v399 = vpop.f32.mrf.mxu0
        %v400 = vadd.f32 0.0, %v399
        %401 = vmatmul.bf16.gmra.mxu0 %v327
        %v402 = vpop.f32.mrf.mxu0
        %v403 = vadd.f32 0.0, %v402
        %v404 = vpop.f32.mrf.mxu0
        %v405 = vadd.f32 0.0, %v404
        %406 = vmatmul.bf16.gmra.mxu0 %v328
        %v407 = vpop.f32.mrf.mxu0
        %v408 = vadd.f32 0.0, %v407
        %v409 = vpop.f32.mrf.mxu0
        %v410 = vadd.f32 0.0, %v409
        %411 = vmatmul.bf16.gmra.mxu0 %v329
        %v412 = vpop.f32.mrf.mxu0
        %v413 = vadd.f32 0.0, %v412
        %v414 = vpop.f32.mrf.mxu0
        %415 = vdwg.mxu0
        %v416 = vadd.f32 %v273, %v393
        %v417 = vadd.f32 %v274, %v395
        %v418 = vadd.f32 %v275, %v398
        %v419 = vadd.f32 %v276, %v400
        %v420 = vadd.f32 %v277, %v403
        %v421 = vadd.f32 %v278, %v405
        %v422 = vadd.f32 %v279, %v408
        %v423 = vadd.f32 %v280, %v410
        %v424 = vadd.f32 %v281, %v413
        %425 = vst [vmem:[#allocation2] sm:$0xff] %v416
        %426 = vst [vmem:[#allocation2 + $0x8] sm:$0xff] %v417
        %427 = vst [vmem:[#allocation2 + $0x10] sm:$0xff] %v418
        %428 = vst [vmem:[#allocation2 + $0x18] sm:$0xff] %v419
        %429 = vst [vmem:[#allocation2 + $0x20] sm:$0xff] %v420
        %430 = vst [vmem:[#allocation2 + $0x28] sm:$0xff] %v421
        %431 = vst [vmem:[#allocation2 + $0x30] sm:$0xff] %v422
        %432 = vst [vmem:[#allocation2 + $0x38] sm:$0xff] %v423
        %433 = vst [vmem:[#allocation2 + $0x40] sm:$0xff] %v424
        // Predicated region
        $region45: #{tpu_custom_call.1} parent=31 // pred_check
          %p434 = pneg %p260
        $region46: #{tpu_custom_call.1} parent=31 // pred_check_branch
          %436 = sbr.rel (%p434) target = $region48
        $region47: #{tpu_custom_call.1} parent=31 // pred_region
          %v437 = vld [vmem:[#allocation2] sm:$0xff]
          %v438 = vld [vmem:[#allocation2 + $0x8] sm:$0xff]
          %v439 = vld [vmem:[#allocation2 + $0x10] sm:$0xff]
          %v440 = vld [vmem:[#allocation2 + $0x18] sm:$0xff]
          %v441 = vld [vmem:[#allocation2 + $0x20] sm:$0xff]
          %v442 = vld [vmem:[#allocation2 + $0x28] sm:$0xff]
          %v443 = vld [vmem:[#allocation2 + $0x30] sm:$0xff]
          %v444 = vld [vmem:[#allocation2 + $0x38] sm:$0xff]
          %v445 = vld [vmem:[#allocation2 + $0x40] sm:$0xff]
          %v446 = vld [vmem:[%s258] sm:$0x1]
          %v448 = vperm.slane %v446, 0
          %v450 = vadd.f32 %v437, %v448
          %v451 = vadd.f32 %v438, %v448
          %v452 = vadd.f32 %v439, %v448
          %v453 = vadd.f32 %v440, %v448
          %v454 = vadd.f32 %v441, %v448
          %v455 = vadd.f32 %v442, %v448
          %v456 = vadd.f32 %v443, %v448
          %v457 = vadd.f32 %v444, %v448
          %v458 = vadd.f32 %v445, %v448
          %v459 = vpack.c.bf16 %v450, %v450
          %v460 = vpack.c.bf16 %v451, %v451
          %v461 = vpack.c.bf16 %v452, %v452
          %v462 = vpack.c.bf16 %v453, %v453
          %v463 = vpack.c.bf16 %v454, %v454
          %v464 = vpack.c.bf16 %v455, %v455
          %v465 = vpack.c.bf16 %v456, %v456
          %v466 = vpack.c.bf16 %v457, %v457
          %v467 = vpack.c.bf16 %v458, %v458
          %468 = vst [vmem:[%s253] sm:$0xf] %v459
          %469 = vst [vmem:[%s253 + $0x4] sm:$0xf] %v460
          %470 = vst [vmem:[%s253 + $0x8] sm:$0xf] %v461
          %471 = vst [vmem:[%s253 + $0xc] sm:$0xf] %v462
          %472 = vst [vmem:[%s253 + $0x10] sm:$0xf] %v463
          %473 = vst [vmem:[%s253 + $0x14] sm:$0xf] %v464
          %474 = vst [vmem:[%s253 + $0x18] sm:$0xf] %v465
          %475 = vst [vmem:[%s253 + $0x1c] sm:$0xf] %v466
          %476 = vst [vmem:[%s253 + $0x20] sm:$0xf] %v467
        $region48: #{tpu_custom_call.1} parent=31 // pred_fallthru
          _
        %s477 = sand.u32 %s132, 1
        %s478 = scalar_lea.sflag [#allocation5], %s477
        %s479 = sand.u32 %s132, 1
        %s480 = smul.addr %s479, 36
        %s481 = scalar_lea.vmem [#allocation8], %s480
        // Predicated region
        $region49: #{tpu_custom_call.1} parent=31 // pred_check
          %p482 = pneg %p142
        $region50: #{tpu_custom_call.1} parent=31 // pred_check_branch
          %484 = sbr.rel (%p482) target = $region52
        $region51: #{tpu_custom_call.1} parent=31 // pred_region
          %s485 = smul.u32 9, %s26
          %487 = vsyncadd %s478, 0
          %s488 = sadd.s32 %s27, %s485
          %s489 = smul.addr %s488, 4
          %s490 = scalar_lea.hbm %s3, %s489
          %s491 = sshll.u32 %s481, 4
          %s492 = int_to_ptr.vmem [resolvable:$true] %s491
          %s493 = sshll.u32 %s490, 4
          %s494 = int_to_ptr.hbm [resolvable:$true] %s493
          %499 = dma.vmem_to_hbm [thread:$0]  %s492, 576, %s494, %s478, 64, 64, 4
        $region52: #{tpu_custom_call.1} parent=31 // pred_fallthru
          _
      $region32: #{tpu_custom_call.1} parent=5 // pred_fallthru
        _
      %p500 = scmp.le.s32.totalorder 2, %s16
      // Predicated region
      $region53: #{tpu_custom_call.1} parent=5 // pred_check
        %p501 = pneg %p500
      $region54: #{tpu_custom_call.1} parent=5 // pred_check_branch
        %503 = sbr.rel (%p501) target = $region56
      $region55: #{tpu_custom_call.1} parent=5 // pred_region
        %s504 = ssub.s32 %s16, 2
        // Predicated region
        $region57: #{tpu_custom_call.1} parent=55 // pred_check
          %p505 = pneg %p148
        $region58: #{tpu_custom_call.1} parent=55 // pred_check_branch
          %507 = sbr.rel (%p505) target = $region60
        $region59: #{tpu_custom_call.1} parent=55 // pred_region
          %s508 = sand.u32 %s133, 1
          %s509 = scalar_lea.sflag [#allocation5], %s508
          %s510 = sand.u32 %s133, 1
          %s511 = smul.addr %s510, 36
          %s512 = scalar_lea.vmem [#allocation8], %s511
          %514 = dma.done %s509, 576
        $region60: #{tpu_custom_call.1} parent=55 // pred_fallthru
          _
      $region56: #{tpu_custom_call.1} parent=5 // pred_fallthru
        _
    $region6: #{tpu_custom_call.1} parent=1 // loop_footer
      %s20 = sadd.s32 1, %s16
    $region7: #{tpu_custom_call.1} parent=1 // loop_footer_branch
      %15 = sbr.rel target = $region3
    $region8: #{tpu_custom_call.1} parent=1 // loop_exit
      _
    %515 = vsyncpa [#allocation4], 1
    %s516 = scalar_lea.sflag [#allocation4], 1
    %517 = vsyncpa %s516, 1
    %518 = vsyncpa [#allocation7], 1
    %519 = vsyncpa [#allocation5], 1
    %s520 = scalar_lea.sflag [#allocation5], 1
    %521 = vsyncpa %s520, 1

</llo_original>
